<compile_context>
chip_gen: v5e
topology: v5e:2x2
jax: 0.10.0
libtpu: 0.0.40
codegen_flags: <defaults>
</compile_context>

<pallas_src>
import functools
import math

import numpy as np
import jax
import jax.numpy as jnp
from jax.experimental import pallas as pl
from jax.experimental.pallas import tpu as pltpu

INPUT_MAX = 255.0
BLUR_SIGMA = 1.5
KSIZE = 11
PAD = KSIZE // 2          # 5
HALO = 8                  # halo rows above/below each strip (>= PAD, multiple of 8)
LINEAR_K = 0.5622
LINEAR_M = 0.43
NOISE_STD = 0.031


# ----------------------------- host-side band-matrix precompute ---------------------------------

def _gaussian_kernel1d(ksize, sigma):
    # Matches torchvision: linspace(-half, half), pdf = exp(-0.5*(x/sigma)^2), normalize.
    half = (ksize - 1) * 0.5
    xs = np.linspace(-half, half, ksize)
    pdf = np.exp(-0.5 * (xs / sigma) ** 2)
    return pdf / pdf.sum()


def _reflect(i, n):
    # torch/np 'reflect' (no edge repeat); requires n > PAD.
    if i < 0:
        return -i
    if i >= n:
        return 2 * n - 2 - i
    return i


def _h_band(w, w1d, scale):
    """(W, W) matrix so that (t @ Hband)[:, c] = scale * sum_k w1d[k] * t[:, reflect(c-PAD+k)]."""
    m = np.zeros((w, w), np.float64)
    for c in range(w):
        for k in range(KSIZE):
            m[_reflect(c - PAD + k, w), c] += w1d[k]
    return (m * scale).astype(np.float32)


def _v_band_blocks(h, th, w1d):
    """(n_strips, TH, TH + 2*HALO) per-strip vertical band, reflect folded in.

    Column q of strip j addresses row (j*TH - HALO + q) of the row window
    [halo_above ; strip ; halo_below].  Taps that reflect at the image border
    always land inside the strip itself, so the clamped/stale halo rows at the
    top/bottom of the image carry exactly zero weight.
    """
    n = h // th
    v = np.zeros((n, th, th + 2 * HALO), np.float64)
    for j in range(n):
        for p in range(th):
            r = j * th + p
            for k in range(KSIZE):
                g = _reflect(r - PAD + k, h)
                v[j, p, g - j * th + HALO] += w1d[k]
    return v.astype(np.float32)


# ----------------------------------------- kernel -----------------------------------------------

def _mix32(v):
    # lowbias32-style integer hash (good avalanche on sequential counters); all uint32 ops.
    v = (v ^ (v >> 16)) * jnp.uint32(0x7FEB352D)
    v = (v ^ (v >> 15)) * jnp.uint32(0x846CA68B)
    return v ^ (v >> 16)


def _camera_kernel(seed_ref, xm_ref, xu_ref, xd_ref, hband_ref, vband_ref, o_ref,
                   *, th, w, img_stride, strip_stride, m_eff, std_eff, out_max):
    m = pl.program_id(0)
    j = pl.program_id(1)

    # Assemble the (HALO + TH + HALO, W) row window; cast to f32 in-kernel.
    xall = jnp.concatenate(
        [xu_ref[0].astype(jnp.float32),
         xm_ref[0].astype(jnp.float32),
         xd_ref[0].astype(jnp.float32)], axis=0)

    # Separable Gaussian blur on the MXU (reflect padding + k*out/in scaling folded into bands).
    tv = jnp.dot(vband_ref[0], xall, preferred_element_type=jnp.float32)        # (TH, W) vertical
    blurred = jnp.dot(tv, hband_ref[...], preferred_element_type=jnp.float32)   # (TH, W) horizontal

    # Additive Gaussian noise: per-pixel counter hash -> two uniforms -> Box-Muller,
    # using both cos and sin outputs so one transcendental pass covers two rows.
    hh = (th + 1) // 2
    rows = jax.lax.broadcasted_iota(jnp.int32, (hh, w), 0)
    cols = jax.lax.broadcasted_iota(jnp.int32, (hh, w), 1)
    base = seed_ref[0] + m * img_stride + j * strip_stride
    cnt = (rows * w + cols + base).astype(jnp.uint32) * jnp.uint32(2)
    u1 = ((_mix32(cnt) >> 8).astype(jnp.int32).astype(jnp.float32) + 0.5) * (1.0 / 16777216.0)
    u2 = (_mix32(cnt + jnp.uint32(1)) >> 8).astype(jnp.int32).astype(jnp.float32) * (1.0 / 16777216.0)
    rad = jnp.sqrt(-2.0 * jnp.log(u1))            # u1 in (0, 1): log is finite
    theta = (2.0 * math.pi) * u2
    z = jnp.concatenate([rad * jnp.cos(theta), rad * jnp.sin(theta)], axis=0)[:th]   # (TH, W)

    # Affine map + noise + clip (all constants pre-folded with output_max).
    y = blurred + (std_eff * z + m_eff)
    o_ref[0] = jnp.clip(y, 0.0, out_max)


# ----------------------------------------- wrapper ----------------------------------------------

def camera_approx(x, seed=0, input_max=INPUT_MAX, output_max=None, block_h=None):
    """x: (N, C, H, W) with values in [0, input_max]. Returns float32 NCHW clipped to
    [0, output_max] — same forward semantics as the PyTorch CameraApprox module."""
    output_max = float(output_max) if output_max is not None else float(input_max)
    N, C, H, W = x.shape
    if H < 8 or W <= PAD:
        raise ValueError("CameraApprox kernel requires H >= 8 and W >= 6 (reflect padding).")
    M = N * C

    # 32-bit inputs go to the kernel untouched (cast happens in-kernel).
    # TODO(synk): keep uint8/bf16 inputs end-to-end by switching to 32/16-row halo blocks.
    if jnp.dtype(x.dtype).itemsize != 4:
        x = x.astype(jnp.float32)
    xm = x.reshape(M, H, W)

    # Row-strip height: largest tile (<=128) dividing H, else whole image.
    if block_h is None:
        block_h = next((c for c in (128, 64, 32, 16, 8) if H % c == 0), H)
    th = block_h if (H % block_h == 0 and block_h % HALO == 0) else H
    n_strips = H // th
    thb = th // HALO            # halo-block stride (only meaningful when n_strips > 1)
    n_hblk = H // HALO          # number of valid HALO-row blocks in H
    hp = th + 2 * HALO

    # Precompute band matrices on the host (tiny); fold linear_k * output_max / input_max in.
    w1d = _gaussian_kernel1d(KSIZE, BLUR_SIGMA)
    k_eff = LINEAR_K * output_max / float(input_max)
    # TODO(synk): for very wide images (W >= ~4k) decompose Hband into lane tiles as well.
    hband = jnp.asarray(_h_band(W, w1d, k_eff))                 # (W, W)
    vband = jnp.asarray(_v_band_blocks(H, th, w1d))             # (n_strips, TH, TH+2*HALO)
    seed_arr = jnp.asarray([seed], dtype=jnp.int32)

    kernel = functools.partial(
        _camera_kernel, th=th, w=W,
        img_stride=(H * W) % (2 ** 31), strip_stride=(th * W) % (2 ** 31),
        m_eff=LINEAR_M * output_max, std_eff=NOISE_STD * output_max, out_max=output_max)

    out = pl.pallas_call(
        kernel,
        out_shape=jax.ShapeDtypeStruct((M, H, W), jnp.float32),
        grid_spec=pltpu.PrefetchScalarGridSpec(
            num_scalar_prefetch=1,
            grid=(M, n_strips),
            in_specs=[
                # strip body
                pl.BlockSpec((1, th, W), lambda m, j, s: (m, j, 0)),
                # 8-row halo above / below (clamped at the image borders; the
                # vertical band assigns zero weight to clamped halo rows).
                pl.BlockSpec((1, HALO, W),
                             lambda m, j, s: (m, jnp.maximum(j * thb - 1, 0), 0)),
                pl.BlockSpec((1, HALO, W),
                             lambda m, j, s: (m, jnp.minimum((j + 1) * thb, n_hblk - 1), 0)),
                # horizontal band matrix: constant block index -> fetched once.
                pl.BlockSpec((W, W), lambda m, j, s: (0, 0)),
                # per-strip vertical band block.
                pl.BlockSpec((1, th, hp), lambda m, j, s: (j, 0, 0)),
            ],
            out_specs=pl.BlockSpec((1, th, W), lambda m, j, s: (m, j, 0)),
        ),
        compiler_params=pltpu.CompilerParams(
            dimension_semantics=("parallel", "parallel"),
            vmem_limit_bytes=64 * 1024 * 1024,
        ),
    )(seed_arr, xm, xm, xm, hband, vband)
    return out.reshape(N, C, H, W)


# ------------------------------------------ test -------------------------------------------------

if __name__ == "__main__":
    key = jax.random.PRNGKey(0)
    N, C, H, W = 2, 3, 16, 16
    x = jax.random.uniform(key, (N, C, H, W), minval=0.0, maxval=255.0, dtype=jnp.float32)

    # block_h=8 -> 2 row strips, so the halo path is exercised even at this tiny size.
    y = camera_approx(x, seed=0, block_h=8)
    jax.block_until_ready(y)

    assert y.shape == (N, C, H, W) and y.dtype == jnp.float32
    assert bool(jnp.all(y >= 0.0)) and bool(jnp.all(y <= 255.0))

    # Deterministic in the seed.
    y_same = camera_approx(x, seed=0, block_h=8)
    assert bool(jnp.all(y == y_same))

    # Independent pure-JAX reference for the deterministic part (blur + affine):
    # the kernel must match it to within the additive noise (std = 0.031*255 ~ 7.9,
    # and the hash-uniform floor bounds |z| < 6, so |diff| < 48 deterministically).
    w1 = jnp.asarray(_gaussian_kernel1d(KSIZE, BLUR_SIGMA), jnp.float32)
    xp = jnp.pad(x / 255.0, ((0, 0), (0, 0), (PAD, PAD), (PAD, PAD)), mode="reflect")
    t = sum(xp[..., :, k:k + W] * w1[k] for k in range(KSIZE))
    b = sum(t[..., k:k + H, :] * w1[k] for k in range(KSIZE))
    ref = jnp.clip(b * LINEAR_K * 255.0 + LINEAR_M * 255.0, 0.0, 255.0)
    diff = y - ref
    assert float(jnp.max(jnp.abs(diff))) < 60.0, float(jnp.max(jnp.abs(diff)))
    assert 5.0 < float(jnp.std(diff)) < 12.0, float(jnp.std(diff))

    print("KERNEL_OK")
</pallas_src>

<mosaic_0001>
module attributes {stable_mosaic.version = 11 : i64} {
  func.func @_camera_kernel(%arg0: i32, %arg1: i32, %arg2: memref<1xi32, #tpu.memory_space<smem>>, %arg3: memref<1x8x16xf32, #tpu.memory_space<vmem>>, %arg4: memref<1x8x16xf32, #tpu.memory_space<vmem>>, %arg5: memref<1x8x16xf32, #tpu.memory_space<vmem>>, %arg6: memref<16x16xf32, #tpu.memory_space<vmem>>, %arg7: memref<1x8x24xf32, #tpu.memory_space<vmem>>, %arg8: memref<1x8x16xf32, #tpu.memory_space<vmem>>) attributes {dimension_semantics = [#tpu.dimension_semantics<parallel>, #tpu.dimension_semantics<parallel>], iteration_bounds = array<i64: 6, 2>, scalar_prefetch = 1 : i64, scratch_operands = 0 : i64, tpu.core_type = #tpu.core_type<tc>, window_params = [{transform_indices = @transform_0, window_bounds = array<i64: 1, 8, 16>}, {transform_indices = @transform_1, window_bounds = array<i64: 1, 8, 16>}, {transform_indices = @transform_2, window_bounds = array<i64: 1, 8, 16>}, {pipeline_mode = #tpu.pipeline_mode<synchronous>, transform_indices = @transform_3, window_bounds = array<i64: 16, 16>}, {transform_indices = @transform_4, window_bounds = array<i64: 1, 8, 24>}, {transform_indices = @transform_5, window_bounds = array<i64: 1, 8, 16>}]} {
    %c0 = arith.constant 0 : index
    %c0_0 = arith.constant 0 : index
    %c0_1 = arith.constant 0 : index
    %0 = vector.load %arg4[%c0, %c0_0, %c0_1] : memref<1x8x16xf32, #tpu.memory_space<vmem>>, vector<1x8x16xf32>
    %1 = vector.shape_cast %0 : vector<1x8x16xf32> to vector<8x16xf32>
    %c0_2 = arith.constant 0 : index
    %c0_3 = arith.constant 0 : index
    %c0_4 = arith.constant 0 : index
    %2 = vector.load %arg3[%c0_2, %c0_3, %c0_4] : memref<1x8x16xf32, #tpu.memory_space<vmem>>, vector<1x8x16xf32>
    %3 = vector.shape_cast %2 : vector<1x8x16xf32> to vector<8x16xf32>
    %c0_5 = arith.constant 0 : index
    %c0_6 = arith.constant 0 : index
    %c0_7 = arith.constant 0 : index
    %4 = vector.load %arg5[%c0_5, %c0_6, %c0_7] : memref<1x8x16xf32, #tpu.memory_space<vmem>>, vector<1x8x16xf32>
    %5 = vector.shape_cast %4 : vector<1x8x16xf32> to vector<8x16xf32>
    %6 = tpu.concatenate %1, %3, %5 in 0 : vector<8x16xf32>, vector<8x16xf32>, vector<8x16xf32> -> vector<24x16xf32>
    %c0_8 = arith.constant 0 : index
    %c0_9 = arith.constant 0 : index
    %c0_10 = arith.constant 0 : index
    %7 = vector.load %arg7[%c0_8, %c0_9, %c0_10] : memref<1x8x24xf32, #tpu.memory_space<vmem>>, vector<1x8x24xf32>
    %8 = vector.shape_cast %7 : vector<1x8x24xf32> to vector<8x24xf32>
    %cst = arith.constant dense<0.000000e+00> : vector<8x16xf32>
    %9 = tpu.matmul %8, %6, %cst {dimension_numbers = #tpu.dot_dimension_numbers<[1], [0], [0], [1], [0, 0, 1, 1], [], []>} : vector<8x24xf32>, vector<24x16xf32>, vector<8x16xf32> -> vector<8x16xf32>
    %c0_11 = arith.constant 0 : index
    %c0_12 = arith.constant 0 : index
    %10 = vector.load %arg6[%c0_11, %c0_12] : memref<16x16xf32, #tpu.memory_space<vmem>>, vector<16x16xf32>
    %cst_13 = arith.constant dense<0.000000e+00> : vector<8x16xf32>
    %11 = tpu.matmul %9, %10, %cst_13 {dimension_numbers = #tpu.dot_dimension_numbers<[1], [0], [0], [1], [0, 0, 1, 1], [], []>} : vector<8x16xf32>, vector<16x16xf32>, vector<8x16xf32> -> vector<8x16xf32>
    %12 = tpu.iota {dimensions = array<i32: 0>} : vector<4x16xi32>
    %13 = tpu.iota {dimensions = array<i32: 1>} : vector<4x16xi32>
    %c0_14 = arith.constant 0 : index
    %14 = memref.load %arg2[%c0_14] : memref<1xi32, #tpu.memory_space<smem>>
    %c256_i32 = arith.constant 256 : i32
    %15 = arith.muli %arg0, %c256_i32 : i32
    %16 = arith.addi %14, %15 : i32
    %c128_i32 = arith.constant 128 : i32
    %17 = arith.muli %arg1, %c128_i32 : i32
    %18 = arith.addi %16, %17 : i32
    %c16_i32 = arith.constant 16 : i32
    %19 = vector.broadcast %c16_i32 : i32 to vector<4x16xi32>
    %20 = arith.muli %12, %19 : vector<4x16xi32>
    %21 = arith.addi %20, %13 : vector<4x16xi32>
    %22 = vector.broadcast %18 : i32 to vector<4x16xi32>
    %23 = arith.addi %21, %22 : vector<4x16xi32>
    %c2_i32 = arith.constant 2 : i32
    %24 = vector.broadcast %c2_i32 : i32 to vector<4x16xi32>
    %25 = arith.muli %23, %24 : vector<4x16xi32>
    %c16_i32_15 = arith.constant 16 : i32
    %26 = vector.broadcast %c16_i32_15 : i32 to vector<4x16xi32>
    %27 = arith.shrui %25, %26 : vector<4x16xi32>
    %28 = arith.xori %25, %27 : vector<4x16xi32>
    %c2146121005_i32 = arith.constant 2146121005 : i32
    %29 = vector.broadcast %c2146121005_i32 : i32 to vector<4x16xi32>
    %30 = arith.muli %28, %29 : vector<4x16xi32>
    %c15_i32 = arith.constant 15 : i32
    %31 = vector.broadcast %c15_i32 : i32 to vector<4x16xi32>
    %32 = arith.shrui %30, %31 : vector<4x16xi32>
    %33 = arith.xori %30, %32 : vector<4x16xi32>
    %c-2073254261_i32 = arith.constant -2073254261 : i32
    %34 = vector.broadcast %c-2073254261_i32 : i32 to vector<4x16xi32>
    %35 = arith.muli %33, %34 : vector<4x16xi32>
    %c16_i32_16 = arith.constant 16 : i32
    %36 = vector.broadcast %c16_i32_16 : i32 to vector<4x16xi32>
    %37 = arith.shrui %35, %36 : vector<4x16xi32>
    %38 = arith.xori %35, %37 : vector<4x16xi32>
    %c8_i32 = arith.constant 8 : i32
    %39 = vector.broadcast %c8_i32 : i32 to vector<4x16xi32>
    %40 = arith.shrui %38, %39 : vector<4x16xi32>
    %41 = arith.sitofp %40 : vector<4x16xi32> to vector<4x16xf32>
    %cst_17 = arith.constant 5.000000e-01 : f32
    %42 = vector.broadcast %cst_17 : f32 to vector<4x16xf32>
    %43 = arith.addf %41, %42 : vector<4x16xf32>
    %cst_18 = arith.constant 5.96046448E-8 : f32
    %44 = vector.broadcast %cst_18 : f32 to vector<4x16xf32>
    %45 = arith.mulf %43, %44 : vector<4x16xf32>
    %c1_i32 = arith.constant 1 : i32
    %46 = vector.broadcast %c1_i32 : i32 to vector<4x16xi32>
    %47 = arith.addi %25, %46 : vector<4x16xi32>
    %c16_i32_19 = arith.constant 16 : i32
    %48 = vector.broadcast %c16_i32_19 : i32 to vector<4x16xi32>
    %49 = arith.shrui %47, %48 : vector<4x16xi32>
    %50 = arith.xori %47, %49 : vector<4x16xi32>
    %c2146121005_i32_20 = arith.constant 2146121005 : i32
    %51 = vector.broadcast %c2146121005_i32_20 : i32 to vector<4x16xi32>
    %52 = arith.muli %50, %51 : vector<4x16xi32>
    %c15_i32_21 = arith.constant 15 : i32
    %53 = vector.broadcast %c15_i32_21 : i32 to vector<4x16xi32>
    %54 = arith.shrui %52, %53 : vector<4x16xi32>
    %55 = arith.xori %52, %54 : vector<4x16xi32>
    %c-2073254261_i32_22 = arith.constant -2073254261 : i32
    %56 = vector.broadcast %c-2073254261_i32_22 : i32 to vector<4x16xi32>
    %57 = arith.muli %55, %56 : vector<4x16xi32>
    %c16_i32_23 = arith.constant 16 : i32
    %58 = vector.broadcast %c16_i32_23 : i32 to vector<4x16xi32>
    %59 = arith.shrui %57, %58 : vector<4x16xi32>
    %60 = arith.xori %57, %59 : vector<4x16xi32>
    %c8_i32_24 = arith.constant 8 : i32
    %61 = vector.broadcast %c8_i32_24 : i32 to vector<4x16xi32>
    %62 = arith.shrui %60, %61 : vector<4x16xi32>
    %63 = arith.sitofp %62 : vector<4x16xi32> to vector<4x16xf32>
    %cst_25 = arith.constant 5.96046448E-8 : f32
    %64 = vector.broadcast %cst_25 : f32 to vector<4x16xf32>
    %65 = arith.mulf %63, %64 : vector<4x16xf32>
    %66 = math.log %45 : vector<4x16xf32>
    %cst_26 = arith.constant -2.000000e+00 : f32
    %67 = vector.broadcast %cst_26 : f32 to vector<4x16xf32>
    %68 = arith.mulf %67, %66 : vector<4x16xf32>
    %69 = math.sqrt %68 : vector<4x16xf32>
    %cst_27 = arith.constant 6.28318548 : f32
    %70 = vector.broadcast %cst_27 : f32 to vector<4x16xf32>
    %71 = arith.mulf %70, %65 : vector<4x16xf32>
    %72 = math.cos %71 : vector<4x16xf32>
    %73 = arith.mulf %69, %72 : vector<4x16xf32>
    %74 = math.sin %71 : vector<4x16xf32>
    %75 = arith.mulf %69, %74 : vector<4x16xf32>
    %76 = tpu.concatenate %73, %75 in 0 : vector<4x16xf32>, vector<4x16xf32> -> vector<8x16xf32>
    %cst_28 = arith.constant 7.905000e+00 : f32
    %77 = vector.broadcast %cst_28 : f32 to vector<8x16xf32>
    %78 = arith.mulf %77, %76 : vector<8x16xf32>
    %cst_29 = arith.constant 1.096500e+02 : f32
    %79 = vector.broadcast %cst_29 : f32 to vector<8x16xf32>
    %80 = arith.addf %78, %79 : vector<8x16xf32>
    %81 = arith.addf %11, %80 : vector<8x16xf32>
    %cst_30 = arith.constant 0.000000e+00 : f32
    %cst_31 = arith.constant 2.550000e+02 : f32
    %82 = vector.broadcast %cst_30 : f32 to vector<8x16xf32>
    %83 = arith.maximumf %82, %81 : vector<8x16xf32>
    %84 = vector.broadcast %cst_31 : f32 to vector<8x16xf32>
    %85 = arith.minimumf %84, %83 : vector<8x16xf32>
    %c0_32 = arith.constant 0 : index
    %c0_33 = arith.constant 0 : index
    %c0_34 = arith.constant 0 : index
    %86 = vector.load %arg8[%c0_32, %c0_33, %c0_34] : memref<1x8x16xf32, #tpu.memory_space<vmem>>, vector<1x8x16xf32>
    %87 = vector.shape_cast %86 : vector<1x8x16xf32> to vector<8x16xf32>
    %88 = vector.shape_cast %85 : vector<8x16xf32> to vector<1x8x16xf32>
    tpu.vector_store %arg8[%c0_32, %c0_33, %c0_34], %88 {strides = array<i32>} : memref<1x8x16xf32, #tpu.memory_space<vmem>>, vector<1x8x16xf32>,
    return
  }
  func.func @transform_0(%arg0: i32, %arg1: i32, %arg2: memref<1xi32, #tpu.memory_space<smem>>) -> (i32, i32, i32) {
    %c0_i32 = arith.constant 0 : i32
    %c0_i32_0 = arith.constant 0 : i32
    return %arg0, %arg1, %c0_i32 : i32, i32, i32
  }
  func.func @transform_1(%arg0: i32, %arg1: i32, %arg2: memref<1xi32, #tpu.memory_space<smem>>) -> (i32, i32, i32) {
    %c1_i32 = arith.constant 1 : i32
    %0 = arith.muli %arg1, %c1_i32 : i32
    %c1_i32_0 = arith.constant 1 : i32
    %1 = arith.subi %0, %c1_i32_0 : i32
    %c0_i32 = arith.constant 0 : i32
    %2 = arith.maxsi %1, %c0_i32 : i32
    %c0_i32_1 = arith.constant 0 : i32
    %c0_i32_2 = arith.constant 0 : i32
    return %arg0, %2, %c0_i32_1 : i32, i32, i32
  }
  func.func @transform_2(%arg0: i32, %arg1: i32, %arg2: memref<1xi32, #tpu.memory_space<smem>>) -> (i32, i32, i32) {
    %c1_i32 = arith.constant 1 : i32
    %0 = arith.addi %arg1, %c1_i32 : i32
    %c1_i32_0 = arith.constant 1 : i32
    %1 = arith.muli %0, %c1_i32_0 : i32
    %c1_i32_1 = arith.constant 1 : i32
    %2 = arith.minsi %1, %c1_i32_1 : i32
    %c0_i32 = arith.constant 0 : i32
    %c0_i32_2 = arith.constant 0 : i32
    return %arg0, %2, %c0_i32 : i32, i32, i32
  }
  func.func @transform_3(%arg0: i32, %arg1: i32, %arg2: memref<1xi32, #tpu.memory_space<smem>>) -> (i32, i32) {
    %c0_i32 = arith.constant 0 : i32
    %c0_i32_0 = arith.constant 0 : i32
    %c0_i32_1 = arith.constant 0 : i32
    return %c0_i32, %c0_i32_0 : i32, i32
  }
  func.func @transform_4(%arg0: i32, %arg1: i32, %arg2: memref<1xi32, #tpu.memory_space<smem>>) -> (i32, i32, i32) {
    %c0_i32 = arith.constant 0 : i32
    %c0_i32_0 = arith.constant 0 : i32
    %c0_i32_1 = arith.constant 0 : i32
    return %arg1, %c0_i32, %c0_i32_0 : i32, i32, i32
  }
  func.func @transform_5(%arg0: i32, %arg1: i32, %arg2: memref<1xi32, #tpu.memory_space<smem>>) -> (i32, i32, i32) {
    %c0_i32 = arith.constant 0 : i32
    %c0_i32_0 = arith.constant 0 : i32
    return %arg0, %arg1, %c0_i32 : i32, i32, i32
  }
}

</mosaic_0001>

<llo_original>
// kernel: tpu_custom_call.1
$region0: #{tpu_custom_call.1}
  #allocation0 [shape = 'u32[]', space=smem, size = 0x4, offset = 0x4, fixed_abs, tag = 'smem constant byte address 0x4 - core index']
  #allocation1 [shape = 'u32[72,128]{1,0:T(1,128)}', space=vmem, size = 0x9000, scoped, tag = 'internal scratch']
  #allocation2 [shape = 's32[1]{0}', space=sflag, size = 0x4, scoped, tag = 'scoped memory for tpu_custom_call.1']
  #allocation3 [shape = 's32[1]{0:T(128)S(6)}', space=smem, size = 0x200, scoped, tag = 'prefetched SMEM operand 0']
  %s0 = inlined_call_operand.<no memory space> [shape: s32[1], index: 0, kind: input, shape index: {}]
  %s1 = inlined_call_operand.hbm [shape: f32[6,16,16], index: 1, kind: input, shape index: {}]
  %s2 = inlined_call_operand.hbm [shape: f32[6,16,16], index: 2, kind: input, shape index: {}]
  %s3 = inlined_call_operand.hbm [shape: f32[6,16,16], index: 3, kind: input, shape index: {}]
  %s4 = inlined_call_operand.hbm [shape: f32[16,16], index: 4, kind: input, shape index: {}]
  %s5 = inlined_call_operand.hbm [shape: f32[2,8,24], index: 5, kind: input, shape index: {}]
  %s6 = inlined_call_operand.hbm [shape: f32[6,16,16], index: 6, kind: output, shape index: {}]
  %s7 = sld [smem:[#allocation0]]
  $region73: #{tpu_custom_call.1} parent=0
    _
  %s9 = ssub.s32 1, %s7
  %s10 = scalar_select 0, %s9, %s7
  %11 = sst [smem:[#allocation3]] %s0
  $region1: #{tpu_custom_call.1} parent=0
    #allocation4 [shape = 'u8[8192]{0}', space=vmem, size = 0x2000, scoped, tag = 'input window, operand 1']
    #allocation5 [shape = 's32[2]{0}', space=sflag, size = 0x8, scoped, tag = 'scoped memory for tpu_custom_call.1']
    #allocation6 [shape = 's32[2]{0}', space=sflag, size = 0x8, scoped, tag = 'scoped memory for tpu_custom_call.1']
    #allocation7 [shape = 'u8[8192]{0}', space=vmem, size = 0x2000, scoped, tag = 'input window, operand 2']
    #allocation8 [shape = 's32[2]{0}', space=sflag, size = 0x8, scoped, tag = 'scoped memory for tpu_custom_call.1']
    #allocation9 [shape = 'u8[8192]{0}', space=vmem, size = 0x2000, scoped, tag = 'input window, operand 3']
    #allocation10 [shape = 'u8[8192]{0}', space=vmem, size = 0x2000, scoped, tag = 'input window, operand 4, single buffered']
    #allocation11 [shape = 's32[1]{0}', space=sflag, size = 0x4, scoped, tag = 'scoped memory for tpu_custom_call.1']
    #allocation12 [shape = 'u8[8192]{0}', space=vmem, size = 0x2000, scoped, tag = 'input window, operand 5']
    #allocation13 [shape = 'u8[8192]{0}', space=vmem, size = 0x2000, scoped, tag = 'output window, operand 0']
    %12 = vsyncpa [#allocation5], 0
    %s13 = scalar_lea.sflag [#allocation5], 1
    %14 = vsyncpa %s13, 0
    %15 = vsyncpa [#allocation8], 0
    %s16 = scalar_lea.sflag [#allocation8], 1
    %17 = vsyncpa %s16, 0
    %18 = vsyncpa [#allocation11], 0
    %19 = vsyncpa [#allocation6], 0
    %s20 = scalar_lea.sflag [#allocation6], 1
    %21 = vsyncpa %s20, 0
    loop: start=0, step=1, limit=14
    $region2: #{tpu_custom_call.1} parent=1 // loop_pre_header
      _
    $region3: #{tpu_custom_call.1} parent=1 // loop_header
      %s23 = sphi 0, %s27
      %p24 = scmp.ge.s32.totalorder %s23, 14
      %s30 = sphi 0, %s42
      %s31 = sphi 0, %s38
      %s32 = sphi 0, %s30
      %s33 = sphi 0, %s31
      %s34 = sphi 0, %s32
      %s35 = sphi 0, %s33
      %s47 = sphi 0, %s49
      %s50 = sphi 0, %s47
      %s51 = sphi 0, %s50
      %s67 = sphi 0, %s51
      %s81 = sphi 0, %s83
      %s84 = sphi 0, %s81
      %s85 = sphi 0, %s84
      %s101 = sphi 0, %s85
      %s115 = sphi 0, %s117
      %s118 = sphi 0, %s115
      %s119 = sphi 0, %s118
      %s135 = sphi 0, %s119
      %s139 = sphi 0, %s139
      %s141 = sphi 0, %s139
      %s142 = sphi 0, %s141
      %s156 = sphi 0, %s142
      %s162 = sphi 0, %s164
      %s165 = sphi 0, %s162
      %s166 = sphi 0, %s165
      %s182 = sphi 0, %s166
      %s190 = sphi 0, %s192
      %s193 = sphi 0, %s190
      %s194 = sphi 0, %s193
      %s210 = sphi 0, %s194
    $region4: #{tpu_custom_call.1} parent=1 // loop_header_branch
      %26 = sbr.rel (%p24) target = $region8
    $region5: #{tpu_custom_call.1} parent=1 // loop_body
      %s28 = ssub.s32 %s23, 1
      %s29 = ssub.s32 %s23, 2
      %s36 = sadd.s32 1, %s31
      %p37 = scmp.ge.s32.totalorder %s36, 2
      %s38 = scalar_select %p37, 0, %s36
      %s39 = sadd.s32 1, %s30
      %s40 = scalar_select %p37, %s39, %s30
      %p41 = scmp.ge.s32.totalorder %s40, 6
      %s42 = scalar_select %p41, 0, %s40
      %s43 = ssub.s32 %s30, %s42
      %s44 = ssub.s32 %s31, %s38
      %s45 = sor.u32 %s43, %s44
      %p46 = scmp.eq.s32.totalorder %s45, 0
      %s48 = sadd.s32 %s47, 1
      %s49 = scalar_select %p46, %s47, %s48
      %p52 = pneg %p46
      %p53 = scmp.eq.s32.totalorder %s23, 11
      %p54 = por %p52, %p53
      %p55 = scmp.ne.s32.totalorder %s47, %s50
      %p56 = scmp.eq.s32.totalorder %s23, 0
      %p57 = por %p55, %p56
      %p58 = scmp.ne.s32.totalorder %s47, %s50
      %p59 = scmp.eq.s32.totalorder %s28, 11
      %p60 = por %p58, %p59
      %p61 = scmp.ne.s32.totalorder %s50, %s51
      %p62 = scmp.eq.s32.totalorder %s28, 0
      %p63 = por %p61, %p62
      %p64 = scmp.ne.s32.totalorder %s50, %s51
      %p65 = scmp.eq.s32.totalorder %s29, 11
      %p66 = por %p64, %p65
      %p68 = scmp.ne.s32.totalorder %s51, %s67
      %p69 = scmp.eq.s32.totalorder %s29, 0
      %p70 = por %p68, %p69
      %s71 = ssub.s32 %s31, 1
      %p72 = scmp.gt.s32.totalorder %s71, 0
      %s73 = scalar_select %p72, %s71, 0
      %s74 = ssub.s32 %s38, 1
      %p75 = scmp.gt.s32.totalorder %s74, 0
      %s76 = scalar_select %p75, %s74, 0
      %s77 = ssub.s32 %s30, %s42
      %s78 = ssub.s32 %s73, %s76
      %s79 = sor.u32 %s77, %s78
      %p80 = scmp.eq.s32.totalorder %s79, 0
      %s82 = sadd.s32 %s81, 1
      %s83 = scalar_select %p80, %s81, %s82
      %p86 = pneg %p80
      %p87 = scmp.eq.s32.totalorder %s23, 11
      %p88 = por %p86, %p87
      %p89 = scmp.ne.s32.totalorder %s81, %s84
      %p90 = scmp.eq.s32.totalorder %s23, 0
      %p91 = por %p89, %p90
      %p92 = scmp.ne.s32.totalorder %s81, %s84
      %p93 = scmp.eq.s32.totalorder %s28, 11
      %p94 = por %p92, %p93
      %p95 = scmp.ne.s32.totalorder %s84, %s85
      %p96 = scmp.eq.s32.totalorder %s28, 0
      %p97 = por %p95, %p96
      %p98 = scmp.ne.s32.totalorder %s84, %s85
      %p99 = scmp.eq.s32.totalorder %s29, 11
      %p100 = por %p98, %p99
      %p102 = scmp.ne.s32.totalorder %s85, %s101
      %p103 = scmp.eq.s32.totalorder %s29, 0
      %p104 = por %p102, %p103
      %s105 = sadd.s32 %s31, 1
      %p106 = scmp.lt.s32.totalorder %s105, 1
      %s107 = scalar_select %p106, %s105, 1
      %s108 = sadd.s32 %s38, 1
      %p109 = scmp.lt.s32.totalorder %s108, 1
      %s110 = scalar_select %p109, %s108, 1
      %s111 = ssub.s32 %s30, %s42
      %s112 = ssub.s32 %s107, %s110
      %s113 = sor.u32 %s111, %s112
      %p114 = scmp.eq.s32.totalorder %s113, 0
      %s116 = sadd.s32 %s115, 1
      %s117 = scalar_select %p114, %s115, %s116
      %p120 = pneg %p114
      %p121 = scmp.eq.s32.totalorder %s23, 11
      %p122 = por %p120, %p121
      %p123 = scmp.ne.s32.totalorder %s115, %s118
      %p124 = scmp.eq.s32.totalorder %s23, 0
      %p125 = por %p123, %p124
      %p126 = scmp.ne.s32.totalorder %s115, %s118
      %p127 = scmp.eq.s32.totalorder %s28, 11
      %p128 = por %p126, %p127
      %p129 = scmp.ne.s32.totalorder %s118, %s119
      %p130 = scmp.eq.s32.totalorder %s28, 0
      %p131 = por %p129, %p130
      %p132 = scmp.ne.s32.totalorder %s118, %s119
      %p133 = scmp.eq.s32.totalorder %s29, 11
      %p134 = por %p132, %p133
      %p136 = scmp.ne.s32.totalorder %s119, %s135
      %p137 = scmp.eq.s32.totalorder %s29, 0
      %p138 = por %p136, %p137
      %s140 = sadd.s32 %s139, 1
      %p143 = scmp.eq.s32.totalorder %s23, 11
      %p144 = scmp.ne.s32.totalorder %s139, %s141
      %p145 = scmp.eq.s32.totalorder %s23, 0
      %p146 = por %p144, %p145
      %p147 = scmp.ne.s32.totalorder %s139, %s141
      %p148 = scmp.eq.s32.totalorder %s28, 11
      %p149 = por %p147, %p148
      %p150 = scmp.ne.s32.totalorder %s141, %s142
      %p151 = scmp.eq.s32.totalorder %s28, 0
      %p152 = por %p150, %p151
      %p153 = scmp.ne.s32.totalorder %s141, %s142
      %p154 = scmp.eq.s32.totalorder %s29, 11
      %p155 = por %p153, %p154
      %p157 = scmp.ne.s32.totalorder %s142, %s156
      %p158 = scmp.eq.s32.totalorder %s29, 0
      %p159 = por %p157, %p158
      %s160 = ssub.s32 %s31, %s38
      %p161 = scmp.eq.s32.totalorder %s160, 0
      %s163 = sadd.s32 %s162, 1
      %s164 = scalar_select %p161, %s162, %s163
      %p167 = pneg %p161
      %p168 = scmp.eq.s32.totalorder %s23, 11
      %p169 = por %p167, %p168
      %p170 = scmp.ne.s32.totalorder %s162, %s165
      %p171 = scmp.eq.s32.totalorder %s23, 0
      %p172 = por %p170, %p171
      %p173 = scmp.ne.s32.totalorder %s162, %s165
      %p174 = scmp.eq.s32.totalorder %s28, 11
      %p175 = por %p173, %p174
      %p176 = scmp.ne.s32.totalorder %s165, %s166
      %p177 = scmp.eq.s32.totalorder %s28, 0
      %p178 = por %p176, %p177
      %p179 = scmp.ne.s32.totalorder %s165, %s166
      %p180 = scmp.eq.s32.totalorder %s29, 11
      %p181 = por %p179, %p180
      %p183 = scmp.ne.s32.totalorder %s166, %s182
      %p184 = scmp.eq.s32.totalorder %s29, 0
      %p185 = por %p183, %p184
      %s186 = ssub.s32 %s30, %s42
      %s187 = ssub.s32 %s31, %s38
      %s188 = sor.u32 %s186, %s187
      %p189 = scmp.eq.s32.totalorder %s188, 0
      %s191 = sadd.s32 %s190, 1
      %s192 = scalar_select %p189, %s190, %s191
      %p195 = pneg %p189
      %p196 = scmp.eq.s32.totalorder %s23, 11
      %p197 = por %p195, %p196
      %p198 = scmp.ne.s32.totalorder %s190, %s193
      %p199 = scmp.eq.s32.totalorder %s23, 0
      %p200 = por %p198, %p199
      %p201 = scmp.ne.s32.totalorder %s190, %s193
      %p202 = scmp.eq.s32.totalorder %s28, 11
      %p203 = por %p201, %p202
      %p204 = scmp.ne.s32.totalorder %s193, %s194
      %p205 = scmp.eq.s32.totalorder %s28, 0
      %p206 = por %p204, %p205
      %p207 = scmp.ne.s32.totalorder %s193, %s194
      %p208 = scmp.eq.s32.totalorder %s29, 11
      %p209 = por %p207, %p208
      %p211 = scmp.ne.s32.totalorder %s194, %s210
      %p212 = scmp.eq.s32.totalorder %s29, 0
      %p213 = por %p211, %p212
      %p214 = scmp.le.s32.totalorder 1, %s23
      %p215 = scmp.lt.s32.totalorder %s23, 13
      %p216 = pnand %p214, %p215
      %p217 = pneg %p216
      // Predicated region
      $region9: #{tpu_custom_call.1} parent=5 // pred_check
        _
      $region10: #{tpu_custom_call.1} parent=5 // pred_check_branch
        %219 = sbr.rel (%p216) target = $region12
      $region11: #{tpu_custom_call.1} parent=5 // pred_region
        %s220 = ssub.s32 %s23, 1
        // Predicated region
        $region13: #{tpu_custom_call.1} parent=11 // pred_check
          %p221 = pneg %p152
        $region14: #{tpu_custom_call.1} parent=11 // pred_check_branch
          %223 = sbr.rel (%p221) target = $region16
        $region15: #{tpu_custom_call.1} parent=11 // pred_region
          %225 = vsyncadd [#allocation11], 0
          %s226 = sshll.u32 %s4, 4
          %s227 = int_to_ptr.hbm [resolvable:$true] %s226
          %s228 = sshll.u32 [#allocation10], 4
          %s229 = int_to_ptr.vmem [resolvable:$true] %s228
          %234 = dma.hbm_to_vmem [thread:$0]  %s227, 256, %s229, [#allocation11], 128, 128, 8
        $region16: #{tpu_custom_call.1} parent=11 // pred_fallthru
          _
      $region12: #{tpu_custom_call.1} parent=5 // pred_fallthru
        _
      %p235 = scmp.lt.s32.totalorder %s23, 12
      // Predicated region
      $region17: #{tpu_custom_call.1} parent=5 // pred_check
        %p236 = pneg %p235
      $region18: #{tpu_custom_call.1} parent=5 // pred_check_branch
        %238 = sbr.rel (%p236) target = $region20
      $region19: #{tpu_custom_call.1} parent=5 // pred_region
        // Predicated region
        $region21: #{tpu_custom_call.1} parent=19 // pred_check
          %p239 = pneg %p57
        $region22: #{tpu_custom_call.1} parent=19 // pred_check_branch
          %241 = sbr.rel (%p239) target = $region24
        $region23: #{tpu_custom_call.1} parent=19 // pred_region
          %s242 = sand.u32 %s23, 1
          %s243 = scalar_lea.sflag [#allocation5], %s242
          %s244 = sand.u32 %s47, 1
          %s245 = smul.addr %s244, 8
          %s246 = scalar_lea.vmem [#allocation4], %s245
          %248 = vsyncadd %s243, 0
          %s249 = smul.addr %s30, 2
          %s250 = sadd.s32 %s31, %s249
          %s251 = smul.addr %s250, 8
          %s252 = scalar_lea.hbm %s1, %s251
          %s254 = sshll.u32 %s252, 4
          %s255 = int_to_ptr.hbm [resolvable:$true] %s254
          %s256 = sshll.u32 %s246, 4
          %s257 = int_to_ptr.vmem [resolvable:$true] %s256
          %259 = dma.hbm_to_vmem [thread:$0]  %s255, 128, %s257, %s243
        $region24: #{tpu_custom_call.1} parent=19 // pred_fallthru
          _
        // Predicated region
        $region25: #{tpu_custom_call.1} parent=19 // pred_check
          %p260 = pneg %p91
        $region26: #{tpu_custom_call.1} parent=19 // pred_check_branch
          %262 = sbr.rel (%p260) target = $region28
        $region27: #{tpu_custom_call.1} parent=19 // pred_region
          %s263 = sand.u32 %s23, 1
          %s264 = scalar_lea.sflag [#allocation8], %s263
          %s265 = sand.u32 %s81, 1
          %s266 = smul.addr %s265, 8
          %s267 = scalar_lea.vmem [#allocation7], %s266
          %s268 = ssub.s32 %s31, 1
          %p269 = scmp.gt.s32.totalorder %s268, 0
          %s270 = scalar_select %p269, %s268, 0
          %272 = vsyncadd %s264, 0
          %s273 = smul.addr %s30, 2
          %s274 = sadd.s32 %s270, %s273
          %s275 = smul.addr %s274, 8
          %s276 = scalar_lea.hbm %s2, %s275
          %s278 = sshll.u32 %s276, 4
          %s279 = int_to_ptr.hbm [resolvable:$true] %s278
          %s280 = sshll.u32 %s267, 4
          %s281 = int_to_ptr.vmem [resolvable:$true] %s280
          %283 = dma.hbm_to_vmem [thread:$0]  %s279, 128, %s281, %s264
        $region28: #{tpu_custom_call.1} parent=19 // pred_fallthru
          _
        // Predicated region
        $region29: #{tpu_custom_call.1} parent=19 // pred_check
          %p284 = pneg %p125
        $region30: #{tpu_custom_call.1} parent=19 // pred_check_branch
          %286 = sbr.rel (%p284) target = $region32
        $region31: #{tpu_custom_call.1} parent=19 // pred_region
          %s287 = sand.u32 %s23, 1
          %s288 = scalar_lea.sflag [#allocation8], %s287
          %s289 = sand.u32 %s115, 1
          %s290 = smul.addr %s289, 8
          %s291 = scalar_lea.vmem [#allocation9], %s290
          %s292 = sadd.s32 %s31, 1
          %p293 = scmp.lt.s32.totalorder %s292, 1
          %s294 = scalar_select %p293, %s292, 1
          %296 = vsyncadd %s288, 0
          %s297 = smul.addr %s30, 2
          %s298 = sadd.s32 %s294, %s297
          %s299 = smul.addr %s298, 8
          %s300 = scalar_lea.hbm %s3, %s299
          %s302 = sshll.u32 %s300, 4
          %s303 = int_to_ptr.hbm [resolvable:$true] %s302
          %s304 = sshll.u32 %s291, 4
          %s305 = int_to_ptr.vmem [resolvable:$true] %s304
          %307 = dma.hbm_to_vmem [thread:$0]  %s303, 128, %s305, %s288
        $region32: #{tpu_custom_call.1} parent=19 // pred_fallthru
          _
        // Predicated region
        $region33: #{tpu_custom_call.1} parent=19 // pred_check
          %p308 = pneg %p172
        $region34: #{tpu_custom_call.1} parent=19 // pred_check_branch
          %310 = sbr.rel (%p308) target = $region36
        $region35: #{tpu_custom_call.1} parent=19 // pred_region
          %s311 = sand.u32 %s23, 1
          %s312 = scalar_lea.sflag [#allocation5], %s311
          %s313 = sand.u32 %s162, 1
          %s314 = smul.addr %s313, 8
          %s315 = scalar_lea.vmem [#allocation12], %s314
          %317 = vsyncadd %s312, 0
          %s318 = smul.addr %s31, 8
          %s319 = scalar_lea.hbm %s5, %s318
          %s321 = sshll.u32 %s319, 4
          %s322 = int_to_ptr.hbm [resolvable:$true] %s321
          %s323 = sshll.u32 %s315, 4
          %s324 = int_to_ptr.vmem [resolvable:$true] %s323
          %326 = dma.hbm_to_vmem [thread:$0]  %s322, 128, %s324, %s312
        $region36: #{tpu_custom_call.1} parent=19 // pred_fallthru
          _
      $region20: #{tpu_custom_call.1} parent=5 // pred_fallthru
        _
      %p327 = scmp.le.s32.totalorder 1, %s23
      %p328 = scmp.lt.s32.totalorder %s23, 13
      %p329 = pnand %p327, %p328
      %p330 = pneg %p329
      // Predicated region
      $region37: #{tpu_custom_call.1} parent=5 // pred_check
        _
      $region38: #{tpu_custom_call.1} parent=5 // pred_check_branch
        %332 = sbr.rel (%p329) target = $region40
      $region39: #{tpu_custom_call.1} parent=5 // pred_region
        %s333 = ssub.s32 %s23, 1
        %s334 = sand.u32 %s28, 1
        %s335 = scalar_lea.sflag [#allocation5], %s334
        %s336 = sand.u32 %s50, 1
        %s337 = smul.addr %s336, 8
        %s338 = scalar_lea.vmem [#allocation4], %s337
        // Predicated region
        $region41: #{tpu_custom_call.1} parent=39 // pred_check
          %p339 = pneg %p63
        $region42: #{tpu_custom_call.1} parent=39 // pred_check_branch
          %341 = sbr.rel (%p339) target = $region44
        $region43: #{tpu_custom_call.1} parent=39 // pred_region
          %343 = dma.done %s335, 128
        $region44: #{tpu_custom_call.1} parent=39 // pred_fallthru
          _
        %s344 = sand.u32 %s28, 1
        %s345 = scalar_lea.sflag [#allocation8], %s344
        %s346 = sand.u32 %s84, 1
        %s347 = smul.addr %s346, 8
        %s348 = scalar_lea.vmem [#allocation7], %s347
        // Predicated region
        $region45: #{tpu_custom_call.1} parent=39 // pred_check
          %p349 = pneg %p97
        $region46: #{tpu_custom_call.1} parent=39 // pred_check_branch
          %351 = sbr.rel (%p349) target = $region48
        $region47: #{tpu_custom_call.1} parent=39 // pred_region
          %353 = dma.done %s345, 128
        $region48: #{tpu_custom_call.1} parent=39 // pred_fallthru
          _
        %s354 = sand.u32 %s28, 1
        %s355 = scalar_lea.sflag [#allocation8], %s354
        %s356 = sand.u32 %s118, 1
        %s357 = smul.addr %s356, 8
        %s358 = scalar_lea.vmem [#allocation9], %s357
        // Predicated region
        $region49: #{tpu_custom_call.1} parent=39 // pred_check
          %p359 = pneg %p131
        $region50: #{tpu_custom_call.1} parent=39 // pred_check_branch
          %361 = sbr.rel (%p359) target = $region52
        $region51: #{tpu_custom_call.1} parent=39 // pred_region
          %363 = dma.done %s355, 128
        $region52: #{tpu_custom_call.1} parent=39 // pred_fallthru
          _
        // Predicated region
        $region53: #{tpu_custom_call.1} parent=39 // pred_check
          %p364 = pneg %p152
        $region54: #{tpu_custom_call.1} parent=39 // pred_check_branch
          %366 = sbr.rel (%p364) target = $region56
        $region55: #{tpu_custom_call.1} parent=39 // pred_region
          %368 = dma.done [#allocation11], 256
        $region56: #{tpu_custom_call.1} parent=39 // pred_fallthru
          _
        %s369 = sand.u32 %s28, 1
        %s370 = scalar_lea.sflag [#allocation5], %s369
        %s371 = sand.u32 %s165, 1
        %s372 = smul.addr %s371, 8
        %s373 = scalar_lea.vmem [#allocation12], %s372
        // Predicated region
        $region57: #{tpu_custom_call.1} parent=39 // pred_check
          %p374 = pneg %p178
        $region58: #{tpu_custom_call.1} parent=39 // pred_check_branch
          %376 = sbr.rel (%p374) target = $region60
        $region59: #{tpu_custom_call.1} parent=39 // pred_region
          %378 = dma.done %s370, 128
        $region60: #{tpu_custom_call.1} parent=39 // pred_fallthru
          _
        %s379 = sand.u32 %s28, 1
        %s380 = scalar_lea.sflag [#allocation5], %s379
        %s381 = sand.u32 %s50, 1
        %s382 = smul.addr %s381, 8
        %s383 = scalar_lea.vmem [#allocation4], %s382
        %p384 = pneg %p63
        %p385 = pneg %p60
        %s386 = sand.u32 %s28, 1
        %s387 = scalar_lea.sflag [#allocation8], %s386
        %s388 = sand.u32 %s84, 1
        %s389 = smul.addr %s388, 8
        %s390 = scalar_lea.vmem [#allocation7], %s389
        %p391 = pneg %p97
        %p392 = pneg %p94
        %s393 = sand.u32 %s28, 1
        %s394 = scalar_lea.sflag [#allocation8], %s393
        %s395 = sand.u32 %s118, 1
        %s396 = smul.addr %s395, 8
        %s397 = scalar_lea.vmem [#allocation9], %s396
        %p398 = pneg %p131
        %p399 = pneg %p128
        %p400 = pneg %p152
        %p401 = pneg %p149
        %s402 = sand.u32 %s28, 1
        %s403 = scalar_lea.sflag [#allocation5], %s402
        %s404 = sand.u32 %s165, 1
        %s405 = smul.addr %s404, 8
        %s406 = scalar_lea.vmem [#allocation12], %s405
        %p407 = pneg %p178
        %p408 = pneg %p175
        %p409 = pneg %p206
        %p410 = pneg %p203
        %s411 = sand.u32 %s193, 1
        %s412 = scalar_lea.sflag [#allocation6], %s411
        %s413 = sand.u32 %s193, 1
        %s414 = smul.addr %s413, 8
        %s415 = scalar_lea.vmem [#allocation13], %s414
        %s416 = ssub.s32 %s33, 1
        %p417 = scmp.gt.s32.totalorder %s416, 0
        %s418 = scalar_select %p417, %s416, 0
        %s419 = sadd.s32 %s33, 1
        %p420 = scmp.lt.s32.totalorder %s419, 1
        %s421 = scalar_select %p420, %s419, 1
        %v422 = vld [vmem:[%s348] sm:$0xff]
        %v423 = vld [vmem:[%s338] sm:$0xff]
        %v424 = vld [vmem:[%s358] sm:$0xff]
        %v425 = vld [vmem:[%s373] sm:$0xff]
        %vm426 = vcmask 195584
        %v428 = vsel %vm426, %v425, 0
        %430 = vmatpush.msra.mxu0 0.0
        %431 = vmatpush.msra.mxu0 0.0
        %432 = vmatpush.msra.mxu0 0.0
        %433 = vmatpush.msra.mxu0 0.0
        %434 = vmatpush.msra.mxu0 0.0
        %435 = vmatpush.msra.mxu0 0.0
        %436 = vmatpush.msra.mxu0 0.0
        %437 = vmatpush.msra.mxu0 0.0
        %438 = vmatpush.msra.mxu0 0.0
        %439 = vmatpush.msra.mxu0 0.0
        %440 = vmatpush.msra.mxu0 0.0
        %441 = vmatpush.msra.mxu0 0.0
        %442 = vmatpush.msra.mxu0 0.0
        %443 = vmatpush.msra.mxu0 %v424
        %444 = vmatpush.msra.mxu0 %v423
        %445 = vmatpush.msra.mxu0 %v422
        %446 = vmatmul.f32.gmra.mxu0 %v428
        %v447 = vpop.f32.mrf.mxu0
        %v448 = vadd.f32 0.0, %v447
        %449 = vdwg.mxu0
        %v450 = vld [vmem:[#allocation10] sm:$0xff]
        %v451 = vld [vmem:[#allocation10 + $0x8] sm:$0xff]
        %v452 = vlaneseq
        %v453 = vshrl.u32 %v452, 7
        %v454 = vlaneseq
        %v455 = vand.u32 %v454, 127
        %s456 = sld [smem:[#allocation3]]
        %s457 = smul.u32 %s32, 256
        %s458 = sadd.s32 %s456, %s457
        %s459 = smul.u32 %s33, 128
        %s460 = sadd.s32 %s458, %s459
        %v461 = vmul.u32 %v453, 16
        %v462 = vadd.s32 %v461, %v455
        %v463 = vstv %s460
        %v464 = vadd.s32 %v462, %v463
        %v465 = vmul.u32 %v464, 2
        %v466 = vshrl.u32 %v465, 16
        %v467 = vxor.u32 %v465, %v466
        %v468 = vmul.u32 %v467, 2146121005
        %v469 = vshrl.u32 %v468, 15
        %v470 = vxor.u32 %v468, %v469
        %v471 = vmul.u32 %v470, 2221713035
        %v472 = vshrl.u32 %v471, 16
        %v473 = vxor.u32 %v471, %v472
        %v474 = vshrl.u32 %v473, 8
        %v475 = vcvt.s32.f32 %v474
        %v476 = vadd.f32 %v475, 0.5
        %v477 = vmul.f32 %v476, 5.9604645e-08
        %v478 = vadd.s32 %v465, 1
        %v479 = vshrl.u32 %v478, 16
        %v480 = vxor.u32 %v478, %v479
        %v481 = vmul.u32 %v480, 2146121005
        %v482 = vshrl.u32 %v481, 15
        %v483 = vxor.u32 %v481, %v482
        %v484 = vmul.u32 %v483, 2221713035
        %v485 = vshrl.u32 %v484, 16
        %v486 = vxor.u32 %v484, %v485
        %v487 = vshrl.u32 %v486, 8
        %v488 = vcvt.s32.f32 %v487
        %v489 = vmul.f32 %v488, 5.9604645e-08
        %v490 = vlog2.pop %v477
        %v491 = vmul.f32 %v490, 0.6931472
        %v492 = vmul.f32 %v491, -2.0
        %v493 = vrsqrt.pop %v492
        %v494 = vmul.f32 %v493, %v492
        %v495 = vmul.f32 %v494, %v493
        %v496 = vmul.f32 0.5, %v495
        %v497 = vsub.f32 1.5, %v496
        %v498 = vmul.f32 %v493, %v497
        %v499 = vmul.f32 %v492, %v498
        %vm500 = vcmp.eq.f32.partialorder %v492, inf
        %v501 = vsel %vm500, %v492, %v499
        %vm502 = vcmp.eq.f32.partialorder %v492, 0.0
        %v503 = vand.u32 %v492, 2147483648
        %v504 = vsel %vm502, %v503, %v501
        %v505 = vmul.f32 %v489, 6.2831855
        %v506 = vand.u32 2147483647, %v505
        %vm507 = vcmp.le.f32.partialorder %v506, 0.7853982
        %vm508 = vcmp.lt.s32.totalorder %v505, 0
        %v509 = vand.u32 %v505, 2139095040
        %v510 = vshrl.u32 %v509, 23
        %v511 = vsub.s32 %v510, 127
        %v512 = vand.u32 2147483647, %v505
        %v513 = vand.u32 %v512, 8388607
        %v514 = vor.u32 %v513, 8388608
        %v515 = vsub.s32 0, %v514
        %v516 = vadd.s32 %v511, 1
        %vm517 = vcmp.gt.s32.totalorder %v516, 0
        %v518 = vsel %vm517, %v516, 0
        %v519 = vshrl.u32 %v518, 5
        %v520 = vand.u32 %v518, 31
        %v521 = vsub.s32 32, %v520
        %v522 = vshrl.u32 683565275, %v521
        %v523 = vshll.u32 683565275, %v520
        %v524 = vshrl.u32 2475754826, %v521
        %v525 = vor.u32 %v523, %v524
        %v526 = vshll.u32 2475754826, %v520
        %v527 = vshrl.u32 2131351028, %v521
        %v528 = vor.u32 %v526, %v527
        %v529 = vshll.u32 2131351028, %v520
        %v530 = vshrl.u32 2102212464, %v521
        %v531 = vor.u32 %v529, %v530
        %v532 = vshll.u32 2102212464, %v520
        %v533 = vshrl.u32 920167782, %v521
        %v534 = vor.u32 %v532, %v533
        %v535 = vshll.u32 920167782, %v520
        %v536 = vshrl.u32 1326507024, %v521
        %v537 = vor.u32 %v535, %v536
        %vm538 = vcmp.lt.s32.totalorder %v519, 1
        %vm539 = vcmp.lt.s32.totalorder %v519, 2
        %vm540 = vcmp.lt.s32.totalorder %v519, 3
        %vm541 = vcmp.lt.s32.totalorder %v519, 4
        %v542 = vsel %vm538, %v522, %v525
        %v543 = vsel %vm541, %v531, 2102212464
        %v544 = vsel %vm540, %v528, %v543
        %v545 = vsel %vm539, %v542, %v544
        %v546 = vsel %vm538, %v525, %v528
        %v547 = vsel %vm541, %v534, 920167782
        %v548 = vsel %vm540, %v531, %v547
        %v549 = vsel %vm539, %v546, %v548
        %v550 = vsel %vm538, %v528, %v531
        %v551 = vsel %vm541, %v537, 1326507024
        %v552 = vsel %vm540, %v534, %v551
        %v553 = vsel %vm539, %v550, %v552
        %v554 = vshll.u32 %v514, 8
        %v555 = vand.u32 %v554, 65535
        %v556 = vshrl.u32 %v554, 16
        %v557 = vand.u32 %v553, 65535
        %v558 = vshrl.u32 %v553, 16
        %v559 = vmul.u32 %v555, %v557
        %v560 = vmul.u32 %v555, %v558
        %v561 = vmul.u32 %v556, %v557
        %v562 = vmul.u32 %v556, %v558
        %v563 = vshll.u32 %v560, 16
        %v564 = vshrl.u32 %v560, 16
        %v565 = vshll.u32 %v561, 16
        %v566 = vshrl.u32 %v561, 16
        %vm567 = vc.u32 %v559, %v563
        %v568 = vsel %vm567, 1, 0
        %v569 = vadd.s32 %v559, %v563
        %v570 = vadd.s32 %v562, %v568
        %vm571 = vc.u32 %v569, %v565
        %v572 = vsel %vm571, 1, 0
        %v573 = vadd.s32 %v569, %v565
        %v574 = vadd.s32 %v570, %v572
        %v575 = vadd.s32 %v574, %v564
        %v576 = vadd.s32 %v575, %v566
        %v577 = vand.u32 %v554, 65535
        %v578 = vshrl.u32 %v554, 16
        %v579 = vand.u32 %v549, 65535
        %v580 = vshrl.u32 %v549, 16
        %v581 = vmul.u32 %v577, %v579
        %v582 = vmul.u32 %v577, %v580
        %v583 = vmul.u32 %v578, %v579
        %v584 = vmul.u32 %v578, %v580
        %v585 = vshll.u32 %v582, 16
        %v586 = vshrl.u32 %v582, 16
        %v587 = vshll.u32 %v583, 16
        %v588 = vshrl.u32 %v583, 16
        %vm589 = vc.u32 %v581, %v585
        %v590 = vsel %vm589, 1, 0
        %v591 = vadd.s32 %v581, %v585
        %v592 = vadd.s32 %v584, %v590
        %vm593 = vc.u32 %v591, %v587
        %v594 = vsel %vm593, 1, 0
        %v595 = vadd.s32 %v591, %v587
        %v596 = vadd.s32 %v592, %v594
        %v597 = vadd.s32 %v596, %v586
        %v598 = vadd.s32 %v597, %v588
        %v599 = vmul.u32 %v554, %v545
        %v600 = vadd.s32 %v576, %v595
        %vm601 = vc.u32 %v576, %v595
        %v602 = vadd.s32 %v598, 1
        %v603 = vsel %vm601, %v602, %v598
        %v604 = vadd.s32 %v599, %v603
        %v605 = vadd.s32 %v604, 536870912
        %v606 = vshrl.u32 %v605, 30
        %v607 = vshll.u32 %v606, 30
        %v608 = vsub.s32 %v604, %v607
        %vm609 = vcmp.lt.s32.totalorder %v608, 0
        %v610 = vsub.s32 0, %v608
        %v611 = vsel %vm609, %v610, %v608
        %v612 = vclz %v611
        %v613 = vsub.s32 %v612, 2
        %vm614 = vcmp.gt.s32.totalorder 0, %v613
        %v615 = vsel %vm614, 0, %v613
        %v616 = vsub.s32 32, %v615
        %v617 = vshll.u32 %v608, %v615
        %v618 = vshrl.u32 %v600, %v616
        %v619 = vor.u32 %v617, %v618
        %v620 = vsub.s32 4294967266, %v615
        %v621 = vadd.s32 %v620, 127
        %v622 = vshll.u32 %v621, 23
        %v623 = vor.u32 4788187, %v622
        %v624 = vand.u32 2147483647, %v623
        %v626 = vcvt.s32.f32 %v619
        %v627 = vmul.f32 %v626, %v624
        %v628 = vxor.u32 %v627, 2147483648
        %v629 = vsel %vm508, %v628, %v627
        %v630 = vsub.s32 4, %v606
        %v631 = vsel %vm508, %v630, %v606
        %v632 = vsel %vm507, %v505, %v629
        %v633 = vsel %vm507, 0, %v631
        %v634 = vmul.f32 %v632, %v632
        %v635 = vmul.f32 %v634, -0.001358992
        %v636 = vadd.f32 %v635, 0.041655596
        %v637 = vmul.f32 %v634, %v636
        %v638 = vadd.f32 %v637, -0.4999988
        %v639 = vmul.f32 %v634, %v638
        %v640 = vadd.f32 1.0, %v639
        %v641 = vmul.f32 %v632, %v632
        %v642 = vmul.f32 %v641, -0.00019511016
        %v643 = vadd.f32 %v642, 0.008332121
        %v644 = vmul.f32 %v641, %v643
        %v645 = vadd.f32 %v644, -0.16666654
        %v646 = vmul.f32 %v641, %v645
        %v647 = vadd.f32 %v646, 1.0
        %v648 = vmul.f32 %v647, %v632
        %vm649 = vweird.f32 %v505
        %v650 = vand.u32 %v633, 3
        %vm651 = vcmp.lt.s32.totalorder %v650, 2
        %vm652 = vcmp.eq.s32.totalorder %v650, 0
        %v653 = vxor.u32 %v648, 2147483648
        %v654 = vsel %vm652, %v640, %v653
        %vm655 = vcmp.eq.s32.totalorder %v650, 2
        %v656 = vxor.u32 %v640, 2147483648
        %v657 = vsel %vm655, %v656, %v648
        %v658 = vsel %vm651, %v654, %v657
        %v659 = vsel %vm649, nan, %v658
        %v660 = vmul.f32 %v504, %v659
        %v661 = vand.u32 2147483647, %v505
        %vm662 = vcmp.le.f32.partialorder %v661, 0.7853982
        %vm663 = vcmp.lt.s32.totalorder %v505, 0
        %v664 = vand.u32 %v505, 2139095040
        %v665 = vshrl.u32 %v664, 23
        %v666 = vsub.s32 %v665, 127
        %v667 = vand.u32 2147483647, %v505
        %v668 = vand.u32 %v667, 8388607
        %v669 = vor.u32 %v668, 8388608
        %v670 = vsub.s32 0, %v669
        %v671 = vadd.s32 %v666, 1
        %vm672 = vcmp.gt.s32.totalorder %v671, 0
        %v673 = vsel %vm672, %v671, 0
        %v674 = vshrl.u32 %v673, 5
        %v675 = vand.u32 %v673, 31
        %v676 = vsub.s32 32, %v675
        %v677 = vshrl.u32 683565275, %v676
        %v678 = vshll.u32 683565275, %v675
        %v679 = vshrl.u32 2475754826, %v676
        %v680 = vor.u32 %v678, %v679
        %v681 = vshll.u32 2475754826, %v675
        %v682 = vshrl.u32 2131351028, %v676
        %v683 = vor.u32 %v681, %v682
        %v684 = vshll.u32 2131351028, %v675
        %v685 = vshrl.u32 2102212464, %v676
        %v686 = vor.u32 %v684, %v685
        %v687 = vshll.u32 2102212464, %v675
        %v688 = vshrl.u32 920167782, %v676
        %v689 = vor.u32 %v687, %v688
        %v690 = vshll.u32 920167782, %v675
        %v691 = vshrl.u32 1326507024, %v676
        %v692 = vor.u32 %v690, %v691
        %vm693 = vcmp.lt.s32.totalorder %v674, 1
        %vm694 = vcmp.lt.s32.totalorder %v674, 2
        %vm695 = vcmp.lt.s32.totalorder %v674, 3
        %vm696 = vcmp.lt.s32.totalorder %v674, 4
        %v697 = vsel %vm693, %v677, %v680
        %v698 = vsel %vm696, %v686, 2102212464
        %v699 = vsel %vm695, %v683, %v698
        %v700 = vsel %vm694, %v697, %v699
        %v701 = vsel %vm693, %v680, %v683
        %v702 = vsel %vm696, %v689, 920167782
        %v703 = vsel %vm695, %v686, %v702
        %v704 = vsel %vm694, %v701, %v703
        %v705 = vsel %vm693, %v683, %v686
        %v706 = vsel %vm696, %v692, 1326507024
        %v707 = vsel %vm695, %v689, %v706
        %v708 = vsel %vm694, %v705, %v707
        %v709 = vshll.u32 %v669, 8
        %v710 = vand.u32 %v709, 65535
        %v711 = vshrl.u32 %v709, 16
        %v712 = vand.u32 %v708, 65535
        %v713 = vshrl.u32 %v708, 16
        %v714 = vmul.u32 %v710, %v712
        %v715 = vmul.u32 %v710, %v713
        %v716 = vmul.u32 %v711, %v712
        %v717 = vmul.u32 %v711, %v713
        %v718 = vshll.u32 %v715, 16
        %v719 = vshrl.u32 %v715, 16
        %v720 = vshll.u32 %v716, 16
        %v721 = vshrl.u32 %v716, 16
        %vm722 = vc.u32 %v714, %v718
        %v723 = vsel %vm722, 1, 0
        %v724 = vadd.s32 %v714, %v718
        %v725 = vadd.s32 %v717, %v723
        %vm726 = vc.u32 %v724, %v720
        %v727 = vsel %vm726, 1, 0
        %v728 = vadd.s32 %v724, %v720
        %v729 = vadd.s32 %v725, %v727
        %v730 = vadd.s32 %v729, %v719
        %v731 = vadd.s32 %v730, %v721
        %v732 = vand.u32 %v709, 65535
        %v733 = vshrl.u32 %v709, 16
        %v734 = vand.u32 %v704, 65535
        %v735 = vshrl.u32 %v704, 16
        %v736 = vmul.u32 %v732, %v734
        %v737 = vmul.u32 %v732, %v735
        %v738 = vmul.u32 %v733, %v734
        %v739 = vmul.u32 %v733, %v735
        %v740 = vshll.u32 %v737, 16
        %v741 = vshrl.u32 %v737, 16
        %v742 = vshll.u32 %v738, 16
        %v743 = vshrl.u32 %v738, 16
        %vm744 = vc.u32 %v736, %v740
        %v745 = vsel %vm744, 1, 0
        %v746 = vadd.s32 %v736, %v740
        %v747 = vadd.s32 %v739, %v745
        %vm748 = vc.u32 %v746, %v742
        %v749 = vsel %vm748, 1, 0
        %v750 = vadd.s32 %v746, %v742
        %v751 = vadd.s32 %v747, %v749
        %v752 = vadd.s32 %v751, %v741
        %v753 = vadd.s32 %v752, %v743
        %v754 = vmul.u32 %v709, %v700
        %v755 = vadd.s32 %v731, %v750
        %vm756 = vc.u32 %v731, %v750
        %v757 = vadd.s32 %v753, 1
        %v758 = vsel %vm756, %v757, %v753
        %v759 = vadd.s32 %v754, %v758
        %v760 = vadd.s32 %v759, 536870912
        %v761 = vshrl.u32 %v760, 30
        %v762 = vshll.u32 %v761, 30
        %v763 = vsub.s32 %v759, %v762
        %vm764 = vcmp.lt.s32.totalorder %v763, 0
        %v765 = vsub.s32 0, %v763
        %v766 = vsel %vm764, %v765, %v763
        %v767 = vclz %v766
        %v768 = vsub.s32 %v767, 2
        %vm769 = vcmp.gt.s32.totalorder 0, %v768
        %v770 = vsel %vm769, 0, %v768
        %v771 = vsub.s32 32, %v770
        %v772 = vshll.u32 %v763, %v770
        %v773 = vshrl.u32 %v755, %v771
        %v774 = vor.u32 %v772, %v773
        %v775 = vsub.s32 4294967266, %v770
        %v776 = vadd.s32 %v775, 127
        %v777 = vshll.u32 %v776, 23
        %v778 = vor.u32 4788187, %v777
        %v779 = vand.u32 2147483647, %v778
        %v781 = vcvt.s32.f32 %v774
        %v782 = vmul.f32 %v781, %v779
        %v783 = vxor.u32 %v782, 2147483648
        %v784 = vsel %vm663, %v783, %v782
        %v785 = vsub.s32 4, %v761
        %v786 = vsel %vm663, %v785, %v761
        %v787 = vsel %vm662, %v505, %v784
        %v788 = vsel %vm662, 0, %v786
        %v789 = vmul.f32 %v787, %v787
        %v790 = vmul.f32 %v789, -0.001358992
        %v791 = vadd.f32 %v790, 0.041655596
        %v792 = vmul.f32 %v789, %v791
        %v793 = vadd.f32 %v792, -0.4999988
        %v794 = vmul.f32 %v789, %v793
        %v795 = vadd.f32 1.0, %v794
        %v796 = vmul.f32 %v787, %v787
        %v797 = vmul.f32 %v796, -0.00019511016
        %v798 = vadd.f32 %v797, 0.008332121
        %v799 = vmul.f32 %v796, %v798
        %v800 = vadd.f32 %v799, -0.16666654
        %v801 = vmul.f32 %v796, %v800
        %v802 = vadd.f32 %v801, 1.0
        %v803 = vmul.f32 %v802, %v787
        %vm804 = vweird.f32 %v505
        %v805 = vadd.s32 %v788, 3
        %v806 = vand.u32 %v805, 3
        %vm807 = vcmp.lt.s32.totalorder %v806, 2
        %vm808 = vcmp.eq.s32.totalorder %v806, 0
        %v809 = vxor.u32 %v803, 2147483648
        %v810 = vsel %vm808, %v795, %v809
        %vm811 = vcmp.eq.s32.totalorder %v806, 2
        %v812 = vxor.u32 %v795, 2147483648
        %v813 = vsel %vm811, %v812, %v803
        %v814 = vsel %vm807, %v810, %v813
        %v815 = vsel %vm804, nan, %v814
        %v816 = vmul.f32 %v504, %v815
        %v818 = vrot.slane %v816, 4
        %vm820 = vcmask 1043456
        %v821 = vsel %vm820, %v660, %v818
        %v822 = vmul.f32 %v821, 7.905
        %v823 = vadd.f32 %v822, 109.65
        %vm824 = vcmask 130048
        %v826 = vsel %vm824, %v448, 0
        %828 = vmatpush.msra.mxu0 0.0
        %829 = vmatpush.msra.mxu0 0.0
        %830 = vmatpush.msra.mxu0 0.0
        %831 = vmatpush.msra.mxu0 0.0
        %832 = vmatpush.msra.mxu0 0.0
        %833 = vmatpush.msra.mxu0 0.0
        %834 = vmatpush.msra.mxu0 0.0
        %835 = vmatpush.msra.mxu0 0.0
        %836 = vmatpush.msra.mxu0 0.0
        %837 = vmatpush.msra.mxu0 0.0
        %838 = vmatpush.msra.mxu0 0.0
        %839 = vmatpush.msra.mxu0 0.0
        %840 = vmatpush.msra.mxu0 0.0
        %841 = vmatpush.msra.mxu0 0.0
        %842 = vmatpush.msra.mxu0 %v451
        %843 = vmatpush.msra.mxu0 %v450
        %844 = vmatmul.f32.gmra.mxu0 %v826
        %v845 = vpop.f32.mrf.mxu0
        %v846 = vadd.f32 %v823, %v845
        %847 = vdwg.mxu0
        %v848 = vmax.f32 %v846, 0.0
        %v849 = vmin.f32 %v848, 255.0
        %850 = vst.msk [vmem:[%s415] sm:$0xff] %vm824, %v849
        %s851 = sand.u32 %s193, 1
        %s852 = scalar_lea.sflag [#allocation6], %s851
        %s853 = sand.u32 %s193, 1
        %s854 = smul.addr %s853, 8
        %s855 = scalar_lea.vmem [#allocation13], %s854
        // Predicated region
        $region61: #{tpu_custom_call.1} parent=39 // pred_check
          %p856 = pneg %p203
        $region62: #{tpu_custom_call.1} parent=39 // pred_check_branch
          %858 = sbr.rel (%p856) target = $region64
        $region63: #{tpu_custom_call.1} parent=39 // pred_region
          %860 = vsyncadd %s852, 0
          %s861 = smul.addr %s32, 2
          %s862 = sadd.s32 %s33, %s861
          %s863 = smul.addr %s862, 8
          %s864 = scalar_lea.hbm %s6, %s863
          %s866 = sshll.u32 %s855, 4
          %s867 = int_to_ptr.vmem [resolvable:$true] %s866
          %s868 = sshll.u32 %s864, 4
          %s869 = int_to_ptr.hbm [resolvable:$true] %s868
          %871 = dma.vmem_to_hbm [thread:$0]  %s867, 128, %s869, %s852
        $region64: #{tpu_custom_call.1} parent=39 // pred_fallthru
          _
      $region40: #{tpu_custom_call.1} parent=5 // pred_fallthru
        _
      %p872 = scmp.le.s32.totalorder 2, %s23
      // Predicated region
      $region65: #{tpu_custom_call.1} parent=5 // pred_check
        %p873 = pneg %p872
      $region66: #{tpu_custom_call.1} parent=5 // pred_check_branch
        %875 = sbr.rel (%p873) target = $region68
      $region67: #{tpu_custom_call.1} parent=5 // pred_region
        %s876 = ssub.s32 %s23, 2
        // Predicated region
        $region69: #{tpu_custom_call.1} parent=67 // pred_check
          %p877 = pneg %p209
        $region70: #{tpu_custom_call.1} parent=67 // pred_check_branch
          %879 = sbr.rel (%p877) target = $region72
        $region71: #{tpu_custom_call.1} parent=67 // pred_region
          %s880 = sand.u32 %s194, 1
          %s881 = scalar_lea.sflag [#allocation6], %s880
          %s882 = sand.u32 %s194, 1
          %s883 = smul.addr %s882, 8
          %s884 = scalar_lea.vmem [#allocation13], %s883
          %886 = dma.done %s881, 128
        $region72: #{tpu_custom_call.1} parent=67 // pred_fallthru
          _
      $region68: #{tpu_custom_call.1} parent=5 // pred_fallthru
        _
    $region6: #{tpu_custom_call.1} parent=1 // loop_footer
      %s27 = sadd.s32 1, %s23
    $region7: #{tpu_custom_call.1} parent=1 // loop_footer_branch
      %22 = sbr.rel target = $region3
    $region8: #{tpu_custom_call.1} parent=1 // loop_exit
      _
    %887 = vsyncpa [#allocation5], 1
    %s888 = scalar_lea.sflag [#allocation5], 1
    %889 = vsyncpa %s888, 1
    %890 = vsyncpa [#allocation8], 1
    %s891 = scalar_lea.sflag [#allocation8], 1
    %892 = vsyncpa %s891, 1
    %893 = vsyncpa [#allocation11], 1
    %894 = vsyncpa [#allocation6], 1
    %s895 = scalar_lea.sflag [#allocation6], 1
    %896 = vsyncpa %s895, 1

</llo_original>
